<compile_context>
chip_gen: v7x
topology: tpu7x:2x2x1
jax: 0.10.0
libtpu: 0.0.40
codegen_flags: <defaults>
</compile_context>

<pallas_src>
import functools
import math

import jax
import jax.numpy as jnp
from jax import lax
from jax.experimental import pallas as pl
from jax.experimental.pallas import tpu as pltpu


def _round_up(x: int, m: int) -> int:
    return ((x + m - 1) // m) * m


# --------------------- Path 1: VMEM-resident table gather ---------------------

def _emb_vmem_kernel(ids_ref, table_ref, o_ref, *, tb, scale):
    """Gather `tb` rows from a VMEM-resident table, scale, store one block."""
    base = pl.program_id(0) * tb

    def body(t, carry):
        row = ids_ref[base + t]                      # scalar read from SMEM (prefetched ids)
        o_ref[pl.ds(t, 1), :] = (table_ref[pl.ds(row, 1), :] * scale).astype(o_ref.dtype)
        return carry

    lax.fori_loop(0, tb, body, 0)


# --------------------- Path 2: HBM table, double-buffered DMA gather ----------

def _emb_hbm_kernel(ids_ref, table_ref, o_ref, rows_vmem, sems, *, tb, scale):
    """Per-row DMA gather from HBM with a 2-slot pipeline across grid steps."""
    i = pl.program_id(0)
    n_blocks = pl.num_programs(0)

    def start_gather(block, slot):
        def body(t, carry):
            row = ids_ref[block * tb + t]
            pltpu.make_async_copy(
                table_ref.at[pl.ds(row, 1)],         # (1, d) row in HBM
                rows_vmem.at[slot, pl.ds(t, 1)],     # (1, d) row in VMEM slot
                sems.at[slot],
            ).start()
            return carry
        lax.fori_loop(0, tb, body, 0)

    @pl.when(i == 0)
    def _():                                         # prime slot 0 with block 0
        start_gather(0, 0)

    @pl.when(i + 1 < n_blocks)
    def _():                                         # overlap: prefetch block i+1
        start_gather(i + 1, (i + 1) % 2)

    slot = i % 2
    # Wait for all tb row copies of this slot (byte-count wait on the slot buffer).
    pltpu.make_async_copy(rows_vmem.at[slot], rows_vmem.at[slot], sems.at[slot]).wait()
    o_ref[...] = (rows_vmem[slot] * scale).astype(o_ref.dtype)


# ------------------------------- wrapper --------------------------------------

def embeddings_forward(ids, table, *, tokens_per_block: int = 128,
                       vmem_table_budget_bytes: int = 32 * 1024 * 1024,
                       use_vmem_table=None):
    """ids: integer array (any shape). table: (vocab, d_model).
    Returns table[ids] * sqrt(d_model) with shape ids.shape + (d_model,)."""
    vocab, d_model = table.shape
    scale = math.sqrt(d_model)                       # scale uses the true d_model
    itemsize = jnp.dtype(table.dtype).itemsize

    # Lane-dense guard: keep the output last dim a multiple of 128.
    d_pad = _round_up(d_model, 128)
    if d_pad != d_model:
        table = jnp.pad(table, ((0, 0), (0, d_pad - d_model)))

    batch_shape = ids.shape
    n = 1
    for s in batch_shape:
        n *= int(s)
    # Clamp so untrusted / out-of-range ids cannot turn into OOB row accesses.
    ids_flat = jnp.clip(ids.reshape((n,)).astype(jnp.int32), 0, vocab - 1)

    # Token-block size: big blocks amortize per-grid-step overhead and keep many
    # row gathers in flight; multiple of 8 sublanes, clamped to the token count.
    tb = min(int(tokens_per_block), n)
    if tb < n:
        tb = max(8, (tb // 8) * 8)
    n_blocks = pl.cdiv(n, tb)
    n_pad = n_blocks * tb
    if n_pad != n:
        # Only the (tiny) ids are padded; padded tokens gather row 0 and land in
        # the clipped part of the final partial output block -> no output slice.
        ids_flat = jnp.pad(ids_flat, (0, n_pad - n))

    table_bytes = vocab * d_pad * itemsize
    out_block_bytes = tb * d_pad * itemsize
    if use_vmem_table is None:
        use_vmem_table = table_bytes <= vmem_table_budget_bytes

    if use_vmem_table:
        vmem_limit = table_bytes + 4 * out_block_bytes + (8 << 20)
        out = pl.pallas_call(
            functools.partial(_emb_vmem_kernel, tb=tb, scale=scale),
            out_shape=jax.ShapeDtypeStruct((n, d_pad), table.dtype),
            grid_spec=pltpu.PrefetchScalarGridSpec(
                num_scalar_prefetch=1,                             # ids -> SMEM
                grid=(n_blocks,),
                in_specs=[pl.BlockSpec((vocab, d_pad), lambda i, ids_s: (0, 0))],
                out_specs=pl.BlockSpec((tb, d_pad), lambda i, ids_s: (i, 0)),
            ),
            compiler_params=pltpu.CompilerParams(
                dimension_semantics=("parallel",),                 # blocks independent
                vmem_limit_bytes=vmem_limit,
            ),
            cost_estimate=pl.CostEstimate(
                flops=n_pad * d_pad,
                transcendentals=0,
                bytes_accessed=table_bytes + n_pad * 4 + n * d_pad * itemsize,
            ),
        )(ids_flat, table)
    else:
        vmem_limit = 6 * out_block_bytes + (8 << 20)
        out = pl.pallas_call(
            functools.partial(_emb_hbm_kernel, tb=tb, scale=scale),
            out_shape=jax.ShapeDtypeStruct((n, d_pad), table.dtype),
            grid_spec=pltpu.PrefetchScalarGridSpec(
                num_scalar_prefetch=1,                             # ids -> SMEM
                grid=(n_blocks,),
                in_specs=[pl.BlockSpec(memory_space=pl.ANY)],      # table stays in HBM
                out_specs=pl.BlockSpec((tb, d_pad), lambda i, ids_s: (i, 0)),
                scratch_shapes=[
                    pltpu.VMEM((2, tb, d_pad), table.dtype),       # double-buffered rows
                    pltpu.SemaphoreType.DMA((2,)),                 # one sem per slot
                ],
            ),
            compiler_params=pltpu.CompilerParams(
                # Pipelined DMA state is carried across grid steps -> sequential axis.
                dimension_semantics=("arbitrary",),
                vmem_limit_bytes=vmem_limit,
            ),
            cost_estimate=pl.CostEstimate(
                flops=n_pad * d_pad,
                transcendentals=0,
                bytes_accessed=n_pad * d_pad * itemsize + n_pad * 4
                + n * d_pad * itemsize,
            ),
        )(ids_flat, table)

    if d_pad != d_model:
        out = out[:, :d_model]
    return out.reshape(*batch_shape, d_model)


if __name__ == "__main__":
    # Small shapes implied by the forward: x = integer token ids (batch, seq).
    B, S = 2, 8
    VOCAB, D_MODEL = 256, 128

    key = jax.random.PRNGKey(0)
    k_ids, k_tab = jax.random.split(key)
    ids = jax.random.randint(k_ids, (B, S), 0, VOCAB, dtype=jnp.int32)
    # nn.Embedding default init ~ N(0, 1); parameter construction is plain JAX glue.
    table = jax.random.normal(k_tab, (VOCAB, D_MODEL), dtype=jnp.float32)

    # Pure-JAX reference mirroring the PyTorch math.
    ref = table[ids] * math.sqrt(D_MODEL)

    # Fast path: the 128 KiB table is auto-selected to live in VMEM.
    out_vmem = jax.block_until_ready(embeddings_forward(ids, table))
    assert out_vmem.shape == (B, S, D_MODEL)
    assert jnp.allclose(out_vmem, ref, atol=1e-5, rtol=1e-5)

    # HBM path: forced, with small blocks so the double-buffered gather pipeline
    # (prime slot 0 + lookahead prefetch) runs across multiple grid steps.
    out_hbm = jax.block_until_ready(
        embeddings_forward(ids, table, tokens_per_block=8, use_vmem_table=False))
    assert jnp.allclose(out_hbm, ref, atol=1e-5, rtol=1e-5)

    print("KERNEL_OK")
</pallas_src>

<mosaic_0001>
module attributes {stable_mosaic.version = 11 : i64} {
  func.func @_emb_vmem_kernel(%arg0: i32, %arg1: memref<16xi32, #tpu.memory_space<smem>>, %arg2: memref<256x128xf32, #tpu.memory_space<vmem>>, %arg3: memref<16x128xf32, #tpu.memory_space<vmem>>) attributes {dimension_semantics = [#tpu.dimension_semantics<parallel>], iteration_bounds = array<i64: 1>, scalar_prefetch = 1 : i64, scratch_operands = 0 : i64, tpu.core_type = #tpu.core_type<tc>, window_params = [{pipeline_mode = #tpu.pipeline_mode<synchronous>, transform_indices = @transform_0, window_bounds = array<i64: 256, 128>}, {transform_indices = @transform_1, window_bounds = array<i64: 16, 128>}]} {
    %c16_i32 = arith.constant 16 : i32
    %0 = arith.muli %arg0, %c16_i32 : i32
    %c0_i32 = arith.constant 0 : i32
    %c16_i32_0 = arith.constant 16 : i32
    %1 = arith.addi %c0_i32, %c16_i32_0 : i32
    %c1_i32 = arith.constant 1 : i32
    scf.for %arg4 = %c0_i32 to %1 step %c1_i32  : i32 {
      %2 = arith.addi %0, %arg4 : i32
      %3 = arith.index_cast %2 : i32 to index
      %4 = memref.load %arg1[%3] : memref<16xi32, #tpu.memory_space<smem>>
      %5 = arith.index_cast %4 : i32 to index
      %c0 = arith.constant 0 : index
      %6 = vector.load %arg2[%5, %c0] : memref<256x128xf32, #tpu.memory_space<vmem>>, vector<1x128xf32>
      %cst = arith.constant 11.3137083 : f32
      %7 = vector.broadcast %cst : f32 to vector<1x128xf32>
      %8 = arith.mulf %6, %7 : vector<1x128xf32>
      %9 = arith.index_cast %arg4 : i32 to index
      %c0_2 = arith.constant 0 : index
      %10 = vector.load %arg3[%9, %c0_2] : memref<16x128xf32, #tpu.memory_space<vmem>>, vector<1x128xf32>
      tpu.vector_store %arg3[%9, %c0_2], %8 {strides = array<i32>} : memref<16x128xf32, #tpu.memory_space<vmem>>, vector<1x128xf32>,
    }
    %c16_i32_1 = arith.constant 16 : i32
    return
  }
  func.func @transform_0(%arg0: i32, %arg1: memref<16xi32, #tpu.memory_space<smem>>) -> (i32, i32) {
    %c0_i32 = arith.constant 0 : i32
    %c0_i32_0 = arith.constant 0 : i32
    %c0_i32_1 = arith.constant 0 : i32
    return %c0_i32, %c0_i32_0 : i32, i32
  }
  func.func @transform_1(%arg0: i32, %arg1: memref<16xi32, #tpu.memory_space<smem>>) -> (i32, i32) {
    %c0_i32 = arith.constant 0 : i32
    %c0_i32_0 = arith.constant 0 : i32
    return %arg0, %c0_i32 : i32, i32
  }
}

</mosaic_0001>

<llo_original>
// kernel: tpu_custom_call.1
$region0: #{tpu_custom_call.1}
  #allocation0 [shape = 'u32[]', space=smem, size = 0x4, offset = 0x4, fixed_abs, tag = 'smem constant byte address 0x4 - core index']
  #allocation1 [shape = 'u32[144,128]{1,0:T(1,128)}', space=vmem, size = 0x12000, scoped, tag = 'internal scratch']
  #allocation2 [shape = 's32[1]{0}', space=sflag, size = 0x4, scoped, tag = 'scoped memory for tpu_custom_call.1']
  #allocation3 [shape = 'u8[512]{0}', space=smem, size = 0x200, scoped, tag = 'prefetched SMEM operand 0']
  %s0 = inlined_call_operand.hbm [shape: s32[16], index: 0, kind: input, shape index: {}]
  %s1 = inlined_call_operand.hbm [shape: f32[256,128], index: 1, kind: input, shape index: {}]
  %s2 = inlined_call_operand.hbm [shape: f32[16,128], index: 2, kind: output, shape index: {}]
  %s3 = sld [smem:[#allocation0]]
  $region25: #{tpu_custom_call.1} parent=0
    _
  %s5 = ssub.s32 1, %s3
  %s6 = scalar_select 0, %s5, %s3
  %8 = dma.hbm_to_smem %s0, 16, [#allocation3], [#allocation2]
  %9 = dma.done [#allocation2], 16
  %10 = sfence
  $region1: #{tpu_custom_call.1} parent=0
    #allocation4 [shape = 'u8[131072]{0}', space=vmem, size = 0x20000, scoped, tag = 'input window, operand 1, single buffered']
    #allocation5 [shape = 's32[1]{0}', space=sflag, size = 0x4, scoped, tag = 'scoped memory for tpu_custom_call.1']
    #allocation6 [shape = 's32[1]{0}', space=sflag, size = 0x4, scoped, tag = 'scoped memory for tpu_custom_call.1']
    #allocation7 [shape = 'u8[8192]{0}', space=vmem, size = 0x2000, scoped, tag = 'output window, operand 0, single buffered']
    %11 = vsyncpa [#allocation5], 0
    %12 = vsyncpa [#allocation6], 0
    // Predicated region
    $region2: #{tpu_custom_call.1} parent=1 // pred_check
      _
    $region3: #{tpu_custom_call.1} parent=1 // pred_check_branch
      %14 = sbr.rel (0) target = $region5
    $region4: #{tpu_custom_call.1} parent=1 // pred_region
      %s16 = ssub.s32 4096, 4096
      %17 = vsyncadd [#allocation5], %s16
      %s18 = sshll.u32 [#allocation4], 4
      %s19 = int_to_ptr.vmem [resolvable:$true] %s18
      %24 = dma.hbm_to_vmem [thread:$0]  %s1, 4096, %s19, [#allocation5], 128, 128, 8
    $region5: #{tpu_custom_call.1} parent=1 // pred_fallthru
      _
    // Predicated region
    $region6: #{tpu_custom_call.1} parent=1 // pred_check
      _
    $region7: #{tpu_custom_call.1} parent=1 // pred_check_branch
      %26 = sbr.rel (0) target = $region9
    $region8: #{tpu_custom_call.1} parent=1 // pred_region
      %27 = dma.done [#allocation5], 4096
    $region9: #{tpu_custom_call.1} parent=1 // pred_fallthru
      _
    %s28 = smul.u32 0, 16
    loop: start=0, step=1, limit=16
    $region10: #{tpu_custom_call.1} parent=1 // loop_pre_header
      _
    $region11: #{tpu_custom_call.1} parent=1 // loop_header
      %s30 = sphi 0, %s34
      %p31 = scmp.ge.s32.totalorder %s30, 16
    $region12: #{tpu_custom_call.1} parent=1 // loop_header_branch
      %33 = sbr.rel (%p31) target = $region16
    $region13: #{tpu_custom_call.1} parent=1 // loop_body
      %s35 = sadd.s32 %s28, %s30
      %s36 = sld [smem:[#allocation3 + %s35]]
      %s37 = scalar_lea.vmem [#allocation4], %s36
      %v38 = vld [vmem:[%s37] sm:$0x1]
      %v39 = vmul.f32 %v38, 11.313708
      %s40 = scalar_lea.vmem [#allocation7], %s30
      %41 = vst [vmem:[%s40] sm:$0x1] %v39
    $region14: #{tpu_custom_call.1} parent=1 // loop_footer
      %s34 = sadd.s32 1, %s30
    $region15: #{tpu_custom_call.1} parent=1 // loop_footer_branch
      %29 = sbr.rel target = $region11
    $region16: #{tpu_custom_call.1} parent=1 // loop_exit
      _
    // Predicated region
    $region17: #{tpu_custom_call.1} parent=1 // pred_check
      _
    $region18: #{tpu_custom_call.1} parent=1 // pred_check_branch
      %43 = sbr.rel (0) target = $region20
    $region19: #{tpu_custom_call.1} parent=1 // pred_region
      %s45 = ssub.s32 256, 256
      %46 = vsyncadd [#allocation6], %s45
      %s47 = sshll.u32 [#allocation7], 4
      %s48 = int_to_ptr.vmem [resolvable:$true] %s47
      %53 = dma.vmem_to_hbm [thread:$0]  %s48, 256, %s2, [#allocation6], 128, 128, 8
    $region20: #{tpu_custom_call.1} parent=1 // pred_fallthru
      _
    // Predicated region
    $region21: #{tpu_custom_call.1} parent=1 // pred_check
      _
    $region22: #{tpu_custom_call.1} parent=1 // pred_check_branch
      %55 = sbr.rel (0) target = $region24
    $region23: #{tpu_custom_call.1} parent=1 // pred_region
      %56 = dma.done [#allocation6], 256
    $region24: #{tpu_custom_call.1} parent=1 // pred_fallthru
      _
    %57 = vsyncpa [#allocation5], 1
    %58 = vsyncpa [#allocation6], 1

</llo_original>
